<compile_context>
chip_gen: v6e
topology: v6e:2x2x1
jax: 0.10.0
libtpu: 0.0.40
codegen_flags: <defaults>
</compile_context>

<pallas_src>
import functools

import jax
import jax.numpy as jnp
from jax.experimental import pallas as pl
from jax.experimental.pallas import tpu as pltpu


def _cdiv(a: int, b: int) -> int:
    return -(-a // b)


def _round_up(x: int, m: int) -> int:
    return _cdiv(x, m) * m


# ---------------------------------------------------------------------------
# Kernels
# ---------------------------------------------------------------------------

def _classifier_kernel_split_k(x1_ref, x2_ref, wt_ref, b_ref, o_ref, *, x_size: int):
    """x_size % 128 == 0: four K=x_size dots against tile-aligned weight slices."""
    dt = wt_ref.dtype
    x1 = x1_ref[...]
    x2 = x2_ref[...]
    acc = jnp.dot(x1.astype(dt), wt_ref[0 * x_size:1 * x_size, :],
                  preferred_element_type=jnp.float32)
    acc += jnp.dot(x2.astype(dt), wt_ref[1 * x_size:2 * x_size, :],
                   preferred_element_type=jnp.float32)
    acc += jnp.dot(jnp.abs(x1 - x2).astype(dt), wt_ref[2 * x_size:3 * x_size, :],
                   preferred_element_type=jnp.float32)
    acc += jnp.dot((x1 * x2).astype(dt), wt_ref[3 * x_size:4 * x_size, :],
                   preferred_element_type=jnp.float32)
    o_ref[...] = (acc + b_ref[...]).astype(o_ref.dtype)


def _classifier_kernel_merged(x1_ref, x2_ref, wt_ref, b_ref, o_ref, feat_ref, *,
                              x_size: int):
    """General x_size: pack the 4 feature pieces into a VMEM scratch and do ONE dot."""
    dt = wt_ref.dtype
    x1 = x1_ref[...]
    x2 = x2_ref[...]
    feat_ref[:, 0 * x_size:1 * x_size] = x1.astype(dt)
    feat_ref[:, 1 * x_size:2 * x_size] = x2.astype(dt)
    feat_ref[:, 2 * x_size:3 * x_size] = jnp.abs(x1 - x2).astype(dt)
    feat_ref[:, 3 * x_size:4 * x_size] = (x1 * x2).astype(dt)
    acc = jnp.dot(feat_ref[...], wt_ref[...], preferred_element_type=jnp.float32)
    o_ref[...] = (acc + b_ref[...]).astype(o_ref.dtype)


# ---------------------------------------------------------------------------
# Parameter preprocessing (run once, NOT per forward call)
# ---------------------------------------------------------------------------

def prepare_params(weight, bias, *, pad_output: bool = True,
                   param_dtype=jnp.float32):
    """Fold the weight transpose (+ optional 128-lane output padding) into params.

    weight: (y_size, 4*x_size) -> wt: (4*x_size, y_out) in `param_dtype`
    bias:   (y_size,)          -> b2: (1, y_out) f32 (bias is always added in f32)

    pad_output=True  : y_out = round_up(y_size, 128) -> unmasked lane-dense stores.
    pad_output=False : y_out = y_size               -> masked stores, no 128-lane
                       write amplification (useful when y_size << 128 on v5e/v6e).
    param_dtype=bf16 : bf16 MXU operands with f32 accumulation (~1e-2 rel tol).
    """
    y_size, in_features = weight.shape
    assert in_features % 4 == 0, "merge_opt=1 expects in_features == 4 * x_size"
    y_out = _round_up(max(y_size, 128), 128) if pad_output else y_size
    wt = jnp.zeros((in_features, y_out), param_dtype)
    wt = wt.at[:, :y_size].set(weight.T.astype(param_dtype))
    b2 = jnp.zeros((1, y_out), jnp.float32)
    b2 = b2.at[:, :y_size].set(bias.astype(jnp.float32))
    return wt, b2


# ---------------------------------------------------------------------------
# Tiling / VMEM sizing
# ---------------------------------------------------------------------------

# Conservative tile budget that fits v7x's 64 MiB/TC VMEM with headroom.
# On v5e/v6e (128 MiB) this could be raised (bigger tiles, fewer step overheads).
_TILE_VMEM_BUDGET = 40 * 1024 * 1024


def _choose_batch_tile(B, x_size, y_out, merged, param_itemsize, tile_b):
    """Pick (tb, n_steps) minimizing batch padding while fitting the VMEM budget.

    Review items applied:
      * choose the number of tiles first, then tb = round_up(cdiv(B, n), 8)
        (minimal padding instead of padding B up to a whole tile multiple);
      * aim for >=2 steps (v7x megacore) and ~4 steps (DMA/compute overlap),
        as long as each step keeps >= 32 rows.
    """
    in_features = 4 * x_size
    f32 = 4
    fixed = (2 * in_features * y_out * param_itemsize   # resident weight (dbl-buf)
             + 2 * 8 * y_out * f32)                      # bias tile (sublane-padded)
    per_row = ((2 * 2 * x_size + 2 * y_out) * f32        # x1,x2 (dbl-buf) + out (dbl-buf)
               + (in_features * param_itemsize if merged else 0))  # feature scratch
    avail = max(_TILE_VMEM_BUDGET - fixed, 8 * per_row)
    tb_cap = max(8, min(_round_up(tile_b, 8), (avail // per_row) // 8 * 8))

    n = max(_cdiv(B, tb_cap),            # fit the VMEM-derived cap
            min(4, _cdiv(B, 32)),        # >=2 (megacore) / ~4 (overlap) steps
            1)
    tb = _round_up(_cdiv(B, n), 8)
    n = _cdiv(B, tb)
    return tb, n


def _vmem_usage_bytes(tb, x_size, y_out, merged, param_itemsize, in_itemsize):
    in_features = 4 * x_size
    usage = 2 * in_features * y_out * param_itemsize      # weight (double-buffered)
    usage += 2 * 8 * y_out * 4                            # bias tile
    usage += 2 * 2 * tb * x_size * in_itemsize            # x1, x2 (double-buffered)
    usage += 2 * tb * y_out * 4                           # output (double-buffered)
    if merged:
        usage += tb * in_features * param_itemsize        # feature scratch
    return usage


# ---------------------------------------------------------------------------
# Forward
# ---------------------------------------------------------------------------

@functools.partial(jax.jit, static_argnames=("y_size", "tile_b"))
def classifier_forward_prepared(x1, x2, wt, b2, *, y_size: int, tile_b: int = 512):
    B, x_size = x1.shape
    in_features, y_out = wt.shape
    assert x2.shape == x1.shape
    assert in_features == 4 * x_size, "wt must be the transposed (4*x_size, y_out) weight"

    merged = (x_size % 128) != 0           # split-K only when slices are tile-aligned
    pitem = jnp.dtype(wt.dtype).itemsize
    in_item = jnp.dtype(x1.dtype).itemsize

    tb, n = _choose_batch_tile(B, x_size, y_out, merged, pitem, tile_b)
    b_pad = n * tb
    if b_pad != B:
        x1 = jnp.pad(x1, ((0, b_pad - B), (0, 0)))
        x2 = jnp.pad(x2, ((0, b_pad - B), (0, 0)))

    if merged:
        kernel = functools.partial(_classifier_kernel_merged, x_size=x_size)
        scratch = [pltpu.VMEM((tb, in_features), wt.dtype)]
    else:
        kernel = functools.partial(_classifier_kernel_split_k, x_size=x_size)
        scratch = []

    vmem_usage = _vmem_usage_bytes(tb, x_size, y_out, merged, pitem, in_item)
    vmem_limit = int(min(max(vmem_usage + 2 * 1024 * 1024, 16 * 1024 * 1024),
                         100 * 1024 * 1024))

    cost = pl.CostEstimate(
        flops=2 * b_pad * in_features * y_out,
        transcendentals=0,
        bytes_accessed=(in_item * 2 * b_pad * x_size     # x1, x2
                        + pitem * in_features * y_out    # weight
                        + 4 * y_out                      # bias
                        + 4 * b_pad * y_out))            # output

    out = pl.pallas_call(
        kernel,
        out_shape=jax.ShapeDtypeStruct((b_pad, y_out), jnp.float32),
        grid_spec=pltpu.PrefetchScalarGridSpec(
            num_scalar_prefetch=0,
            grid=(n,),
            in_specs=[
                pl.BlockSpec((tb, x_size), lambda i: (i, 0)),
                pl.BlockSpec((tb, x_size), lambda i: (i, 0)),
                pl.BlockSpec((in_features, y_out), lambda i: (0, 0)),  # VMEM-resident
                pl.BlockSpec((1, y_out), lambda i: (0, 0)),            # VMEM-resident
            ],
            out_specs=pl.BlockSpec((tb, y_out), lambda i: (i, 0)),
            scratch_shapes=scratch,
        ),
        compiler_params=pltpu.CompilerParams(
            dimension_semantics=("parallel",),   # megacore sharding on v7x
            vmem_limit_bytes=vmem_limit,
        ),
        cost_estimate=cost,
    )(x1, x2, wt, b2)

    # Skip the trailing slice when it would be a no-op (extra HBM pass otherwise).
    if b_pad == B and y_out == y_size:
        return out
    return out[:B, :y_size]


def classifier_forward(x1, x2, weight, bias, *, pad_output: bool = True,
                       param_dtype=jnp.float32, tile_b: int = 512):
    """Convenience wrapper.  NOTE: production code should call prepare_params once
    and reuse classifier_forward_prepared; this wrapper re-transposes/pads the
    weight on every call (an extra un-hidden HBM pass)."""
    wt, b2 = prepare_params(weight, bias, pad_output=pad_output,
                            param_dtype=param_dtype)
    return classifier_forward_prepared(x1, x2, wt, b2,
                                       y_size=weight.shape[0], tile_b=tile_b)


def classifier_reference(x1, x2, weight, bias):
    feat = jnp.concatenate([x1, x2, jnp.abs(x1 - x2), x1 * x2], axis=1)
    return jnp.dot(feat, weight.T, precision=jax.lax.Precision.HIGHEST) + bias


# TODO(synk): weight_norm_on=True would fold g * v / ||v|| into `weight` inside
# prepare_params (still a plain linear at inference); dropout is identity in eval.


if __name__ == "__main__":
    key = jax.random.PRNGKey(0)

    def make_case(key, B, x_size, y_size):
        k1, k2, kw, kb, key = jax.random.split(key, 5)
        in_features = 4 * x_size
        bound = 1.0 / (in_features ** 0.5)
        x1 = jax.random.normal(k1, (B, x_size), dtype=jnp.float32)
        x2 = jax.random.normal(k2, (B, x_size), dtype=jnp.float32)
        w = jax.random.uniform(kw, (y_size, in_features),
                               minval=-bound, maxval=bound, dtype=jnp.float32)
        b = jax.random.uniform(kb, (y_size,),
                               minval=-bound, maxval=bound, dtype=jnp.float32)
        return key, x1, x2, w, b

    # --- Test 1: small shapes (B=8, x=32, y=16) -> merged (single-dot) path,
    #     unpadded (masked-store) output.  K=128, f32 operands. -------------
    key, x1, x2, w, b = make_case(key, 8, 32, 16)
    out = jax.block_until_ready(classifier_forward(x1, x2, w, b, pad_output=False))
    ref = classifier_reference(x1, x2, w, b)
    assert out.shape == (8, 16)
    assert jnp.allclose(out, ref, atol=5e-5, rtol=5e-5), "mismatch (small/merged)"

    # --- Test 2: B=300, x=128, y=48 -> split-K path, batch tiling (4 steps of
    #     80 rows, minimal padding), 128-lane padded output.  Tolerance 2e-3
    #     documents default-MXU vs HIGHEST-precision reference at K=512. -----
    key, a1, a2, w2, b2_ = make_case(key, 300, 128, 48)
    out2 = jax.block_until_ready(classifier_forward(a1, a2, w2, b2_))
    ref2 = classifier_reference(a1, a2, w2, b2_)
    assert out2.shape == (300, 48)
    assert jnp.allclose(out2, ref2, atol=2e-3, rtol=2e-3), "mismatch (tiled/split-K)"

    # --- Test 3: bf16 MXU operands with f32 accumulation (smoke test),
    #     B=64 -> 2 grid steps (exercises megacore split path). --------------
    key, c1, c2, w3, b3_ = make_case(key, 64, 64, 32)
    out3 = jax.block_until_ready(
        classifier_forward(c1, c2, w3, b3_, param_dtype=jnp.bfloat16))
    ref3 = classifier_reference(c1, c2, w3, b3_)
    assert out3.shape == (64, 32)
    assert jnp.allclose(out3, ref3, atol=5e-2, rtol=5e-2), "mismatch (bf16 path)"

    print("KERNEL_OK")
</pallas_src>

<mosaic_0001>
module attributes {stable_mosaic.version = 11 : i64} {
  func.func @_classifier_kernel_merged(%arg0: i32, %arg1: memref<8x32xf32, #tpu.memory_space<vmem>>, %arg2: memref<8x32xf32, #tpu.memory_space<vmem>>, %arg3: memref<128x16xf32, #tpu.memory_space<vmem>>, %arg4: memref<1x16xf32, #tpu.memory_space<vmem>>, %arg5: memref<8x16xf32, #tpu.memory_space<vmem>>, %arg6: memref<8x128xf32, #tpu.memory_space<vmem>>) attributes {dimension_semantics = [#tpu.dimension_semantics<parallel>], iteration_bounds = array<i64: 1>, scalar_prefetch = 0 : i64, scratch_operands = 1 : i64, tpu.core_type = #tpu.core_type<tc>, window_params = [{transform_indices = @transform_0, window_bounds = array<i64: 8, 32>}, {transform_indices = @transform_1, window_bounds = array<i64: 8, 32>}, {pipeline_mode = #tpu.pipeline_mode<synchronous>, transform_indices = @transform_2, window_bounds = array<i64: 128, 16>}, {pipeline_mode = #tpu.pipeline_mode<synchronous>, transform_indices = @transform_3, window_bounds = array<i64: 1, 16>}, {transform_indices = @transform_4, window_bounds = array<i64: 8, 16>}]} {
    %c0 = arith.constant 0 : index
    %c0_0 = arith.constant 0 : index
    %0 = vector.load %arg1[%c0, %c0_0] : memref<8x32xf32, #tpu.memory_space<vmem>>, vector<8x32xf32>
    %c0_1 = arith.constant 0 : index
    %c0_2 = arith.constant 0 : index
    %1 = vector.load %arg2[%c0_1, %c0_2] : memref<8x32xf32, #tpu.memory_space<vmem>>, vector<8x32xf32>
    %c0_3 = arith.constant 0 : index
    %c0_4 = arith.constant 0 : index
    %2 = vector.load %arg6[%c0_3, %c0_4] : memref<8x128xf32, #tpu.memory_space<vmem>>, vector<8x32xf32>
    tpu.vector_store %arg6[%c0_3, %c0_4], %0 {strides = array<i32>} : memref<8x128xf32, #tpu.memory_space<vmem>>, vector<8x32xf32>,
    %c0_5 = arith.constant 0 : index
    %c32 = arith.constant 32 : index
    %3 = vector.load %arg6[%c0_5, %c32] : memref<8x128xf32, #tpu.memory_space<vmem>>, vector<8x32xf32>
    tpu.vector_store %arg6[%c0_5, %c32], %1 {strides = array<i32>} : memref<8x128xf32, #tpu.memory_space<vmem>>, vector<8x32xf32>,
    %4 = arith.subf %0, %1 : vector<8x32xf32>
    %5 = math.absf %4 : vector<8x32xf32>
    %c0_6 = arith.constant 0 : index
    %c64 = arith.constant 64 : index
    %6 = vector.load %arg6[%c0_6, %c64] : memref<8x128xf32, #tpu.memory_space<vmem>>, vector<8x32xf32>
    tpu.vector_store %arg6[%c0_6, %c64], %5 {strides = array<i32>} : memref<8x128xf32, #tpu.memory_space<vmem>>, vector<8x32xf32>,
    %7 = arith.mulf %0, %1 : vector<8x32xf32>
    %c0_7 = arith.constant 0 : index
    %c96 = arith.constant 96 : index
    %8 = vector.load %arg6[%c0_7, %c96] : memref<8x128xf32, #tpu.memory_space<vmem>>, vector<8x32xf32>
    tpu.vector_store %arg6[%c0_7, %c96], %7 {strides = array<i32>} : memref<8x128xf32, #tpu.memory_space<vmem>>, vector<8x32xf32>,
    %c0_8 = arith.constant 0 : index
    %c0_9 = arith.constant 0 : index
    %9 = vector.load %arg6[%c0_8, %c0_9] : memref<8x128xf32, #tpu.memory_space<vmem>>, vector<8x128xf32>
    %c0_10 = arith.constant 0 : index
    %c0_11 = arith.constant 0 : index
    %10 = vector.load %arg3[%c0_10, %c0_11] : memref<128x16xf32, #tpu.memory_space<vmem>>, vector<128x16xf32>
    %cst = arith.constant dense<0.000000e+00> : vector<8x16xf32>
    %11 = tpu.matmul %9, %10, %cst {dimension_numbers = #tpu.dot_dimension_numbers<[1], [0], [0], [1], [0, 0, 1, 1], [], []>} : vector<8x128xf32>, vector<128x16xf32>, vector<8x16xf32> -> vector<8x16xf32>
    %c0_12 = arith.constant 0 : index
    %c0_13 = arith.constant 0 : index
    %12 = vector.load %arg4[%c0_12, %c0_13] : memref<1x16xf32, #tpu.memory_space<vmem>>, vector<1x16xf32>
    %13 = vector.broadcast %12 : vector<1x16xf32> to vector<8x16xf32>
    %14 = arith.addf %11, %13 : vector<8x16xf32>
    %c0_14 = arith.constant 0 : index
    %c0_15 = arith.constant 0 : index
    %15 = vector.load %arg5[%c0_14, %c0_15] : memref<8x16xf32, #tpu.memory_space<vmem>>, vector<8x16xf32>
    tpu.vector_store %arg5[%c0_14, %c0_15], %14 {strides = array<i32>} : memref<8x16xf32, #tpu.memory_space<vmem>>, vector<8x16xf32>,
    return
  }
  func.func @transform_0(%arg0: i32) -> (i32, i32) {
    %c0_i32 = arith.constant 0 : i32
    %c0_i32_0 = arith.constant 0 : i32
    return %arg0, %c0_i32 : i32, i32
  }
  func.func @transform_1(%arg0: i32) -> (i32, i32) {
    %c0_i32 = arith.constant 0 : i32
    %c0_i32_0 = arith.constant 0 : i32
    return %arg0, %c0_i32 : i32, i32
  }
  func.func @transform_2(%arg0: i32) -> (i32, i32) {
    %c0_i32 = arith.constant 0 : i32
    %c0_i32_0 = arith.constant 0 : i32
    %c0_i32_1 = arith.constant 0 : i32
    return %c0_i32, %c0_i32_0 : i32, i32
  }
  func.func @transform_3(%arg0: i32) -> (i32, i32) {
    %c0_i32 = arith.constant 0 : i32
    %c0_i32_0 = arith.constant 0 : i32
    %c0_i32_1 = arith.constant 0 : i32
    return %c0_i32, %c0_i32_0 : i32, i32
  }
  func.func @transform_4(%arg0: i32) -> (i32, i32) {
    %c0_i32 = arith.constant 0 : i32
    %c0_i32_0 = arith.constant 0 : i32
    return %arg0, %c0_i32 : i32, i32
  }
}

</mosaic_0001>

<llo_original>
// kernel: classifier_forward_prepared.1
$region0: #{classifier_forward_prepared.1}
  #allocation0 [shape = 'u32[]', space=smem, size = 0x4, offset = 0x4, fixed_abs, tag = 'smem constant byte address 0x4 - core index']
  #allocation1 [shape = 'u32[144,128]{1,0:T(1,128)}', space=vmem, size = 0x12000, scoped, tag = 'internal scratch']
  #allocation2 [shape = 'f32[8,128]{1,0:T(8,128)}', space=vmem, size = 0x1000, scoped, tag = 'scratch operand']
  %s0 = inlined_call_operand.vmem [shape: f32[8,32], index: 0, kind: input, shape index: {}]
  %s1 = inlined_call_operand.vmem [shape: f32[8,32], index: 1, kind: input, shape index: {}]
  %s2 = inlined_call_operand.vmem [shape: f32[128,16], index: 2, kind: input, shape index: {}]
  %s3 = inlined_call_operand.vmem [shape: f32[1,16], index: 3, kind: input, shape index: {}]
  %s4 = inlined_call_operand.hbm [shape: f32[8,16], index: 4, kind: output, shape index: {}]
  %s5 = sld [smem:[#allocation0]]
  $region26: #{classifier_forward_prepared.1} parent=0
    _
  %s7 = ssub.s32 1, %s5
  %s8 = scalar_select 0, %s7, %s5
  $region1: #{classifier_forward_prepared.1} parent=0
    #allocation3 [shape = 'u8[4096]{0}', space=vmem, size = 0x1000, scoped, tag = 'output window, operand 0, single buffered']
    #allocation4 [shape = 's32[1]{0}', space=sflag, size = 0x4, scoped, tag = 'scoped memory for classifier_forward_prepared.1']
    %9 = vsyncpa [#allocation4], 0
    // Predicated region
    $region2: #{classifier_forward_prepared.1} parent=1 // pred_check
      _
    $region3: #{classifier_forward_prepared.1} parent=1 // pred_check_branch
      %11 = sbr.rel (0) target = $region5
    $region4: #{classifier_forward_prepared.1} parent=1 // pred_region
      _
    $region5: #{classifier_forward_prepared.1} parent=1 // pred_fallthru
      _
    // Predicated region
    $region6: #{classifier_forward_prepared.1} parent=1 // pred_check
      _
    $region7: #{classifier_forward_prepared.1} parent=1 // pred_check_branch
      %13 = sbr.rel (0) target = $region9
    $region8: #{classifier_forward_prepared.1} parent=1 // pred_region
      _
    $region9: #{classifier_forward_prepared.1} parent=1 // pred_fallthru
      _
    // Predicated region
    $region10: #{classifier_forward_prepared.1} parent=1 // pred_check
      _
    $region11: #{classifier_forward_prepared.1} parent=1 // pred_check_branch
      %15 = sbr.rel (0) target = $region13
    $region12: #{classifier_forward_prepared.1} parent=1 // pred_region
      _
    $region13: #{classifier_forward_prepared.1} parent=1 // pred_fallthru
      _
    // Predicated region
    $region14: #{classifier_forward_prepared.1} parent=1 // pred_check
      _
    $region15: #{classifier_forward_prepared.1} parent=1 // pred_check_branch
      %17 = sbr.rel (0) target = $region17
    $region16: #{classifier_forward_prepared.1} parent=1 // pred_region
      _
    $region17: #{classifier_forward_prepared.1} parent=1 // pred_fallthru
      _
    %v18 = vld [vmem:[%s0] sm:$0xff]
    %v19 = vld [vmem:[%s1] sm:$0xff]
    %vm20 = vcmask 261120
    %21 = vst.msk [vmem:[#allocation2] sm:$0xff] %vm20, %v18
    %23 = vrot.lane.b32.xlu0 %v19, 32
    %v24 = vpop.permute.xlu0 %23
    %vm26 = vcmask 523520
    %27 = vst.msk [vmem:[#allocation2] sm:$0xff] %vm26, %v24
    %v28 = vsub.f32 %v18, %v19
    %v29 = vand.u32 2147483647, %v28
    %31 = vrot.lane.b32.xlu0 %v29, 64
    %v32 = vpop.permute.xlu0 %31
    %vm34 = vcmask 785920
    %35 = vst.msk [vmem:[#allocation2] sm:$0xff] %vm34, %v32
    %v36 = vmul.f32 %v18, %v19
    %38 = vrot.lane.b32.xlu0 %v36, 96
    %v39 = vpop.permute.xlu0 %38
    %vm41 = vcmask 1048320
    %42 = vst.msk [vmem:[#allocation2] sm:$0xff] %vm41, %v39
    %v43 = vld [vmem:[#allocation2] sm:$0xff]
    %v44 = vld [vmem:[%s2] sm:$0xff]
    %v45 = vld [vmem:[%s2 + $0x8] sm:$0xff]
    %v46 = vld [vmem:[%s2 + $0x10] sm:$0xff]
    %v47 = vld [vmem:[%s2 + $0x18] sm:$0xff]
    %v48 = vld [vmem:[%s2 + $0x20] sm:$0xff]
    %v49 = vld [vmem:[%s2 + $0x28] sm:$0xff]
    %v50 = vld [vmem:[%s2 + $0x30] sm:$0xff]
    %v51 = vld [vmem:[%s2 + $0x38] sm:$0xff]
    %v52 = vld [vmem:[%s2 + $0x40] sm:$0xff]
    %v53 = vld [vmem:[%s2 + $0x48] sm:$0xff]
    %v54 = vld [vmem:[%s2 + $0x50] sm:$0xff]
    %v55 = vld [vmem:[%s2 + $0x58] sm:$0xff]
    %v56 = vld [vmem:[%s2 + $0x60] sm:$0xff]
    %v57 = vld [vmem:[%s2 + $0x68] sm:$0xff]
    %v58 = vld [vmem:[%s2 + $0x70] sm:$0xff]
    %v59 = vld [vmem:[%s2 + $0x78] sm:$0xff]
    %v60 = vld [vmem:[%s3] sm:$0x1]
    %v62 = vlaneseq
    %v63 = vshrl.u32 %v62, 7
    %v64 = vsub.s32 0, %v63
    %v65 = vrot.slane %v60, %v64
    %67 = vmatprep.subr.mxu0 0.0
    %68 = vmatpush1.msra.mxu0 %v59
    %69 = vmatprep.subr.mxu0 0.0
    %70 = vmatpush1.msra.mxu0 %v58
    %71 = vmatprep.subr.mxu0 0.0
    %72 = vmatpush1.msra.mxu0 %v57
    %73 = vmatprep.subr.mxu0 0.0
    %74 = vmatpush1.msra.mxu0 %v56
    %75 = vmatprep.subr.mxu0 0.0
    %76 = vmatpush1.msra.mxu0 %v55
    %77 = vmatprep.subr.mxu0 0.0
    %78 = vmatpush1.msra.mxu0 %v54
    %79 = vmatprep.subr.mxu0 0.0
    %80 = vmatpush1.msra.mxu0 %v53
    %81 = vmatprep.subr.mxu0 0.0
    %82 = vmatpush1.msra.mxu0 %v52
    %83 = vmatprep.subr.mxu0 0.0
    %84 = vmatpush1.msra.mxu0 %v51
    %85 = vmatprep.subr.mxu0 0.0
    %86 = vmatpush1.msra.mxu0 %v50
    %87 = vmatprep.subr.mxu0 0.0
    %88 = vmatpush1.msra.mxu0 %v49
    %89 = vmatprep.subr.mxu0 0.0
    %90 = vmatpush1.msra.mxu0 %v48
    %91 = vmatprep.subr.mxu0 0.0
    %92 = vmatpush1.msra.mxu0 %v47
    %93 = vmatprep.subr.mxu0 0.0
    %94 = vmatpush1.msra.mxu0 %v46
    %95 = vmatprep.subr.mxu0 0.0
    %96 = vmatpush1.msra.mxu0 %v45
    %97 = vmatprep.subr.mxu0 0.0
    %98 = vmatpush1.msra.mxu0 %v44
    %99 = vmatprep.subr.mxu0 0.0
    %100 = vmatpush2.msra.mxu0 0.0
    %101 = vmatprep.subr.mxu0 0.0
    %102 = vmatpush2.msra.mxu0 0.0
    %103 = vmatprep.subr.mxu0 0.0
    %104 = vmatpush2.msra.mxu0 0.0
    %105 = vmatprep.subr.mxu0 0.0
    %106 = vmatpush2.msra.mxu0 0.0
    %107 = vmatprep.subr.mxu0 0.0
    %108 = vmatpush2.msra.mxu0 0.0
    %109 = vmatprep.subr.mxu0 0.0
    %110 = vmatpush2.msra.mxu0 0.0
    %111 = vmatprep.subr.mxu0 0.0
    %112 = vmatpush2.msra.mxu0 0.0
    %113 = vmatprep.subr.mxu0 0.0
    %114 = vmatpush2.msra.mxu0 0.0
    %115 = vmatprep.subr.mxu0 0.0
    %116 = vmatpush2.msra.mxu0 0.0
    %117 = vmatprep.subr.mxu0 0.0
    %118 = vmatpush2.msra.mxu0 0.0
    %119 = vmatprep.subr.mxu0 0.0
    %120 = vmatpush2.msra.mxu0 0.0
    %121 = vmatprep.subr.mxu0 0.0
    %122 = vmatpush2.msra.mxu0 0.0
    %123 = vmatprep.subr.mxu0 0.0
    %124 = vmatpush2.msra.mxu0 0.0
    %125 = vmatprep.subr.mxu0 0.0
    %126 = vmatpush2.msra.mxu0 0.0
    %127 = vmatprep.subr.mxu0 0.0
    %128 = vmatpush2.msra.mxu0 0.0
    %129 = vmatprep.subr.mxu0 0.0
    %130 = vmatpush2.msra.mxu0 0.0
    %131 = vmatprep.mubr.f32.mxu0 0.0
    %132 = vmatmul.mubr.f32.gmra.mxu0 %v43
    %v133 = vpop.f32.mrf.mxu0
    %v134 = vadd.f32 %v65, %v133
    %v135 = vpop.f32.mrf.mxu0
    %136 = vdwg.mxu0
    %vm137 = vcmask 130048
    %138 = vst.msk [vmem:[#allocation3] sm:$0xff] %vm137, %v134
    // Predicated region
    $region18: #{classifier_forward_prepared.1} parent=1 // pred_check
      _
    $region19: #{classifier_forward_prepared.1} parent=1 // pred_check_branch
      %140 = sbr.rel (0) target = $region21
    $region20: #{classifier_forward_prepared.1} parent=1 // pred_region
      %s142 = ssub.s32 128, 128
      %143 = vsyncadd [#allocation4], %s142
      %s145 = sshll.u32 [#allocation3], 4
      %s146 = int_to_ptr.vmem [resolvable:$true] %s145
      %148 = dma.vmem_to_hbm [thread:$0]  %s146, 128, %s4, [#allocation4]
    $region21: #{classifier_forward_prepared.1} parent=1 // pred_fallthru
      _
    // Predicated region
    $region22: #{classifier_forward_prepared.1} parent=1 // pred_check
      _
    $region23: #{classifier_forward_prepared.1} parent=1 // pred_check_branch
      %150 = sbr.rel (0) target = $region25
    $region24: #{classifier_forward_prepared.1} parent=1 // pred_region
      %151 = dma.done [#allocation4], 128
    $region25: #{classifier_forward_prepared.1} parent=1 // pred_fallthru
      _
    %152 = vsyncpa [#allocation4], 1

</llo_original>
